<compile_context>
chip_gen: v7x
topology: tpu7x:2x2x1
jax: 0.10.0
libtpu: 0.0.40
codegen_flags: <defaults>
</compile_context>

<pallas_src>
import functools

import numpy as np
import jax
import jax.numpy as jnp
from jax.experimental import pallas as pl
from jax.experimental.pallas import tpu as pltpu  # noqa: F401  (TPU backend)

# ---- problem sizes (match __str__: 2 example terms + 6 context terms) ----
EXAMPLES_LEN = 2
CONTEXT_LEN = 6
K = 4                                  # number of blocks
L = 128                                # block size (lane dim)
P = EXAMPLES_LEN + CONTEXT_LEN + 1     # 9 slots incl. the identity slot
D = K * L                              # 512
B = 2                                  # batch


@functools.lru_cache(maxsize=None)
def _dft_mats(blk):
    """Fused DFT operands: forward (blk, 2*blk) = [cos | -sin],
    inverse (2*blk, blk) = [[cos], [-sin]] (symmetric matrices)."""
    m = np.arange(blk, dtype=np.float64)
    ang = 2.0 * np.pi * np.outer(m, m) / blk
    cos = np.cos(ang).astype(np.float32)
    sin = np.sin(ang).astype(np.float32)
    dfwd = np.concatenate([cos, -sin], axis=1)   # t @ dfwd -> [Re | Im] of FFT
    dinv = np.concatenate([cos, -sin], axis=0)   # [Re|Im] @ dinv / L -> ifft real part
    return jnp.asarray(dfwd), jnp.asarray(dinv)


def _formula_kernel(wbig_ref, wid_ref, x_ref, dfwd_ref, dinv_ref, out_ref):
    # wbig_ref: (6*B*K, S*B*K)  block-diag attention weights  (w[:, :S] ⊗ I_{B*K})
    # wid_ref:  (6*B*K, 1)      identity-slot weight per DFT row
    # x_ref:    (S*B*K, L)      input rows, row = slot*(B*K) + b*K + k
    # dfwd_ref: (L, 2L)         fused forward DFT  [cos | -sin]
    # dinv_ref: (2L, L)         fused inverse DFT  [[cos], [-sin]]
    # out_ref:  (B*K, L)        lane/sublane-dense output slab
    g = out_ref.shape[0]                  # B*K rows per term
    blk = out_ref.shape[1]                # L

    # attention-weighted slot sums: one row per (term, batch, block)
    t = jnp.dot(wbig_ref[...], x_ref[...],
                preferred_element_type=jnp.float32)            # (6*g, L)

    # fused forward DFT; identity slot (delta at pos 0) adds +w_id to the real part
    f = jnp.dot(t, dfwd_ref[...],
                preferred_element_type=jnp.float32)            # (6*g, 2L)
    tr = f[:, :blk] + wid_ref[...]                             # (6*g, L) real
    ti = f[:, blk:]                                            # (6*g, L) imag

    def grp(a, i):                       # rows of term i  (n1,n2,n3,d1,d2,d3)
        return a[i * g:(i + 1) * g]

    def cmul(ar, ai, br, bi):            # complex product (f32 on the VPU)
        return ar * br - ai * bi, ar * bi + ai * br

    # binding (circular convolution) == product of spectra
    nr, ni = cmul(grp(tr, 0), grp(ti, 0), grp(tr, 1), grp(ti, 1))
    nr, ni = cmul(nr, ni, grp(tr, 2), grp(ti, 2))               # (g, L)
    dr, di = cmul(grp(tr, 3), grp(ti, 3), grp(tr, 4), grp(ti, 4))
    dr, di = cmul(dr, di, grp(tr, 5), grp(ti, 5))               # (g, L)

    # unbinding (circular correlation) == multiply by conj(d)
    cr = nr * dr + ni * di
    ci = ni * dr - nr * di

    # fused inverse DFT (real part), 256-wide contraction
    c = jnp.concatenate([cr, ci], axis=1)                       # (g, 2L)
    out = jnp.dot(c, dinv_ref[...],
                  preferred_element_type=jnp.float32) * (1.0 / blk)
    out_ref[...] = out                                          # (B*K, L) full store


@functools.partial(jax.jit, static_argnames=("k",))
def general_learnable_formula(params, x, ctx, k=K):
    """params: (6, E+C+1) raw parameters; x: (B, E, D); ctx: (B, C, D) -> (B, D)."""
    b = x.shape[0]
    xc = jnp.concatenate([x, ctx], axis=1).astype(jnp.float32)  # (B, S, D)
    s = xc.shape[1]                                             # real slots (no identity)
    d = xc.shape[2]
    blk = d // k
    g = b * k                                                   # rows per term
    rows = 6 * g

    # softmax over the S+1 slots (identity is the last slot) -- hoisted from kernel
    w = jax.nn.softmax(params.astype(jnp.float32), axis=-1)     # (6, S+1)

    # block-diagonal attention operator  W_big[t*g+r, p*g+r'] = w[t,p]*(r==r')
    eye = jnp.eye(g, dtype=jnp.float32)
    wbig = (w[:, :s, None, None] * eye[None, None, :, :])       # (6, S, g, g)
    wbig = jnp.transpose(wbig, (0, 2, 1, 3)).reshape(rows, s * g)
    wid = jnp.repeat(w[:, s], g).reshape(rows, 1)               # identity weight per row

    # inputs as (S*g, L) rows: row = slot*g + b_idx*k + k_idx
    x2 = jnp.transpose(xc.reshape(b, s, k, blk), (1, 0, 2, 3)).reshape(s * g, blk)

    dfwd, dinv = _dft_mats(blk)

    flops = (2 * rows * (s * g) * blk            # attention matmul
             + 2 * rows * blk * (2 * blk)        # forward DFT
             + 2 * g * (2 * blk) * blk           # inverse DFT
             + 14 * g * blk)                     # complex elementwise
    bytes_accessed = 4 * (wbig.size + wid.size + x2.size
                          + dfwd.size + dinv.size + g * blk)

    out = pl.pallas_call(
        _formula_kernel,
        out_shape=jax.ShapeDtypeStruct((g, blk), jnp.float32),
        cost_estimate=pl.CostEstimate(flops=flops, transcendentals=0,
                                      bytes_accessed=bytes_accessed),
    )(wbig, wid, x2, dfwd, dinv)

    return out.reshape(b, d)


def ref_forward(params, x, ctx, k=K):
    """Independent NumPy reference (uses np.fft for circular conv/corr)."""
    params = np.asarray(params, np.float64)
    x = np.asarray(x, np.float64)
    ctx = np.asarray(ctx, np.float64)
    b = x.shape[0]
    xc = np.concatenate([x, ctx], axis=1)
    blk = xc.shape[2] // k
    xc = xc.reshape(b, -1, k, blk)
    ident = np.zeros((b, 1, k, blk), xc.dtype)
    ident[:, :, :, 0] = 1.0
    xf = np.concatenate([xc, ident], axis=1).reshape(b, -1, k * blk)  # (B,P,D)

    w = np.exp(params - params.max(-1, keepdims=True))
    w = w / w.sum(-1, keepdims=True)                                  # (6,P)
    terms = np.einsum('tp,bpd->btd', w, xf).reshape(b, 6, k, blk)
    F = np.fft.fft(terms, axis=-1)
    nf = F[:, 0] * F[:, 1] * F[:, 2]
    df = F[:, 3] * F[:, 4] * F[:, 5]
    out = np.real(np.fft.ifft(nf * np.conj(df), axis=-1))
    return out.reshape(b, -1)


if __name__ == "__main__":
    key = jax.random.PRNGKey(0)
    k_par, k_x, k_ctx = jax.random.split(key, 3)

    # 6 learnable vectors (n1,n2,n3,d1,d2,d3), each of length P  (torch.randn)
    params = jax.random.normal(k_par, (6, P), dtype=jnp.float32)
    x = jax.random.normal(k_x, (B, EXAMPLES_LEN, D), dtype=jnp.float32)
    ctx = jax.random.normal(k_ctx, (B, CONTEXT_LEN, D), dtype=jnp.float32)

    out = general_learnable_formula(params, x, ctx)
    out = jax.block_until_ready(out)
    assert out.shape == (B, D), out.shape

    ref = ref_forward(params, x, ctx)
    rel_err = np.max(np.abs(np.asarray(out) - ref)) / (np.max(np.abs(ref)) + 1e-12)
    assert rel_err < 1e-2, f"mismatch vs reference, rel_err={rel_err}"

    print("KERNEL_OK")
</pallas_src>

<mosaic_0001>
module attributes {stable_mosaic.version = 11 : i64} {
  func.func @_formula_kernel(%arg0: memref<48x64xf32, #tpu.memory_space<vmem>>, %arg1: memref<48x1xf32, #tpu.memory_space<vmem>>, %arg2: memref<64x128xf32, #tpu.memory_space<vmem>>, %arg3: memref<128x256xf32, #tpu.memory_space<vmem>>, %arg4: memref<256x128xf32, #tpu.memory_space<vmem>>, %arg5: memref<8x128xf32, #tpu.memory_space<vmem>>) attributes {dimension_semantics = [], scalar_prefetch = 0 : i64, scratch_operands = 0 : i64, tpu.core_type = #tpu.core_type<tc>} {
    %c0 = arith.constant 0 : index
    %c0_0 = arith.constant 0 : index
    %0 = vector.load %arg0[%c0, %c0_0] : memref<48x64xf32, #tpu.memory_space<vmem>>, vector<48x64xf32>
    %c0_1 = arith.constant 0 : index
    %c0_2 = arith.constant 0 : index
    %1 = vector.load %arg2[%c0_1, %c0_2] : memref<64x128xf32, #tpu.memory_space<vmem>>, vector<64x128xf32>
    %cst = arith.constant dense<0.000000e+00> : vector<48x128xf32>
    %2 = tpu.matmul %0, %1, %cst {dimension_numbers = #tpu.dot_dimension_numbers<[1], [0], [0], [1], [0, 0, 1, 1], [], []>} : vector<48x64xf32>, vector<64x128xf32>, vector<48x128xf32> -> vector<48x128xf32>
    %c0_3 = arith.constant 0 : index
    %c0_4 = arith.constant 0 : index
    %3 = vector.load %arg3[%c0_3, %c0_4] : memref<128x256xf32, #tpu.memory_space<vmem>>, vector<128x256xf32>
    %cst_5 = arith.constant dense<0.000000e+00> : vector<48x256xf32>
    %4 = tpu.matmul %2, %3, %cst_5 {dimension_numbers = #tpu.dot_dimension_numbers<[1], [0], [0], [1], [0, 0, 1, 1], [], []>} : vector<48x128xf32>, vector<128x256xf32>, vector<48x256xf32> -> vector<48x256xf32>
    %5 = vector.extract_strided_slice %4 {offsets = [0, 0], sizes = [48, 128], strides = [1, 1]} : vector<48x256xf32> to vector<48x128xf32>
    %c0_6 = arith.constant 0 : index
    %c0_7 = arith.constant 0 : index
    %6 = vector.load %arg1[%c0_6, %c0_7] : memref<48x1xf32, #tpu.memory_space<vmem>>, vector<48x1xf32>
    %7 = vector.broadcast %6 : vector<48x1xf32> to vector<48x128xf32>
    %8 = arith.addf %5, %7 : vector<48x128xf32>
    %9 = vector.extract_strided_slice %4 {offsets = [0, 128], sizes = [48, 128], strides = [1, 1]} : vector<48x256xf32> to vector<48x128xf32>
    %10 = vector.extract_strided_slice %8 {offsets = [0, 0], sizes = [8, 128], strides = [1, 1]} : vector<48x128xf32> to vector<8x128xf32>
    %11 = vector.extract_strided_slice %9 {offsets = [0, 0], sizes = [8, 128], strides = [1, 1]} : vector<48x128xf32> to vector<8x128xf32>
    %12 = vector.extract_strided_slice %8 {offsets = [8, 0], sizes = [8, 128], strides = [1, 1]} : vector<48x128xf32> to vector<8x128xf32>
    %13 = vector.extract_strided_slice %9 {offsets = [8, 0], sizes = [8, 128], strides = [1, 1]} : vector<48x128xf32> to vector<8x128xf32>
    %14 = arith.mulf %10, %12 : vector<8x128xf32>
    %15 = arith.mulf %11, %13 : vector<8x128xf32>
    %16 = arith.subf %14, %15 : vector<8x128xf32>
    %17 = arith.mulf %10, %13 : vector<8x128xf32>
    %18 = arith.mulf %11, %12 : vector<8x128xf32>
    %19 = arith.addf %17, %18 : vector<8x128xf32>
    %20 = vector.extract_strided_slice %8 {offsets = [16, 0], sizes = [8, 128], strides = [1, 1]} : vector<48x128xf32> to vector<8x128xf32>
    %21 = vector.extract_strided_slice %9 {offsets = [16, 0], sizes = [8, 128], strides = [1, 1]} : vector<48x128xf32> to vector<8x128xf32>
    %22 = arith.mulf %16, %20 : vector<8x128xf32>
    %23 = arith.mulf %19, %21 : vector<8x128xf32>
    %24 = arith.subf %22, %23 : vector<8x128xf32>
    %25 = arith.mulf %16, %21 : vector<8x128xf32>
    %26 = arith.mulf %19, %20 : vector<8x128xf32>
    %27 = arith.addf %25, %26 : vector<8x128xf32>
    %28 = vector.extract_strided_slice %8 {offsets = [24, 0], sizes = [8, 128], strides = [1, 1]} : vector<48x128xf32> to vector<8x128xf32>
    %29 = vector.extract_strided_slice %9 {offsets = [24, 0], sizes = [8, 128], strides = [1, 1]} : vector<48x128xf32> to vector<8x128xf32>
    %30 = vector.extract_strided_slice %8 {offsets = [32, 0], sizes = [8, 128], strides = [1, 1]} : vector<48x128xf32> to vector<8x128xf32>
    %31 = vector.extract_strided_slice %9 {offsets = [32, 0], sizes = [8, 128], strides = [1, 1]} : vector<48x128xf32> to vector<8x128xf32>
    %32 = arith.mulf %28, %30 : vector<8x128xf32>
    %33 = arith.mulf %29, %31 : vector<8x128xf32>
    %34 = arith.subf %32, %33 : vector<8x128xf32>
    %35 = arith.mulf %28, %31 : vector<8x128xf32>
    %36 = arith.mulf %29, %30 : vector<8x128xf32>
    %37 = arith.addf %35, %36 : vector<8x128xf32>
    %38 = vector.extract_strided_slice %8 {offsets = [40, 0], sizes = [8, 128], strides = [1, 1]} : vector<48x128xf32> to vector<8x128xf32>
    %39 = vector.extract_strided_slice %9 {offsets = [40, 0], sizes = [8, 128], strides = [1, 1]} : vector<48x128xf32> to vector<8x128xf32>
    %40 = arith.mulf %34, %38 : vector<8x128xf32>
    %41 = arith.mulf %37, %39 : vector<8x128xf32>
    %42 = arith.subf %40, %41 : vector<8x128xf32>
    %43 = arith.mulf %34, %39 : vector<8x128xf32>
    %44 = arith.mulf %37, %38 : vector<8x128xf32>
    %45 = arith.addf %43, %44 : vector<8x128xf32>
    %46 = arith.mulf %24, %42 : vector<8x128xf32>
    %47 = arith.mulf %27, %45 : vector<8x128xf32>
    %48 = arith.addf %46, %47 : vector<8x128xf32>
    %49 = arith.mulf %27, %42 : vector<8x128xf32>
    %50 = arith.mulf %24, %45 : vector<8x128xf32>
    %51 = arith.subf %49, %50 : vector<8x128xf32>
    %52 = tpu.concatenate %48, %51 in 1 : vector<8x128xf32>, vector<8x128xf32> -> vector<8x256xf32>
    %c0_8 = arith.constant 0 : index
    %c0_9 = arith.constant 0 : index
    %53 = vector.load %arg4[%c0_8, %c0_9] : memref<256x128xf32, #tpu.memory_space<vmem>>, vector<256x128xf32>
    %cst_10 = arith.constant dense<0.000000e+00> : vector<8x128xf32>
    %54 = tpu.matmul %52, %53, %cst_10 {dimension_numbers = #tpu.dot_dimension_numbers<[1], [0], [0], [1], [0, 0, 1, 1], [], []>} : vector<8x256xf32>, vector<256x128xf32>, vector<8x128xf32> -> vector<8x128xf32>
    %cst_11 = arith.constant 7.812500e-03 : f32
    %55 = vector.broadcast %cst_11 : f32 to vector<8x128xf32>
    %56 = arith.mulf %54, %55 : vector<8x128xf32>
    %c0_12 = arith.constant 0 : index
    %c0_13 = arith.constant 0 : index
    %57 = vector.load %arg5[%c0_12, %c0_13] : memref<8x128xf32, #tpu.memory_space<vmem>>, vector<8x128xf32>
    tpu.vector_store %arg5[%c0_12, %c0_13], %56 {strides = array<i32>} : memref<8x128xf32, #tpu.memory_space<vmem>>, vector<8x128xf32>,
    return
  }
}

</mosaic_0001>

<llo_original>
// kernel: general_learnable_formula.1
$region0: #{general_learnable_formula.1}
  #allocation0 [shape = 'u32[]', space=smem, size = 0x4, offset = 0x4, fixed_abs, tag = 'smem constant byte address 0x4 - core index']
  #allocation1 [shape = 'u32[144,128]{1,0:T(1,128)}', space=vmem, size = 0x12000, scoped, tag = 'internal scratch']
  %s0 = inlined_call_operand.vmem [shape: f32[48,64], index: 0, kind: input, shape index: {}]
  %s1 = inlined_call_operand.vmem [shape: f32[48,1], index: 1, kind: input, shape index: {}]
  %s2 = inlined_call_operand.vmem [shape: f32[64,128], index: 2, kind: input, shape index: {}]
  %s3 = inlined_call_operand.vmem [shape: f32[128,256], index: 3, kind: input, shape index: {}]
  %s4 = inlined_call_operand.vmem [shape: f32[256,128], index: 4, kind: input, shape index: {}]
  %s5 = inlined_call_operand.vmem [shape: f32[8,128], index: 5, kind: output, shape index: {}]
  %s6 = sld [smem:[#allocation0]]
  $region30: #{general_learnable_formula.1} parent=0
    _
  %s8 = ssub.s32 1, %s6
  %s9 = scalar_select 0, %s8, %s6
  // Predicated region
  $region2: #{general_learnable_formula.1} parent=0 // pred_check
    _
  $region3: #{general_learnable_formula.1} parent=0 // pred_check_branch
    %11 = sbr.rel (0) target = $region5
  $region4: #{general_learnable_formula.1} parent=0 // pred_region
    _
  $region5: #{general_learnable_formula.1} parent=0 // pred_fallthru
    _
  // Predicated region
  $region6: #{general_learnable_formula.1} parent=0 // pred_check
    _
  $region7: #{general_learnable_formula.1} parent=0 // pred_check_branch
    %13 = sbr.rel (0) target = $region9
  $region8: #{general_learnable_formula.1} parent=0 // pred_region
    _
  $region9: #{general_learnable_formula.1} parent=0 // pred_fallthru
    _
  // Predicated region
  $region10: #{general_learnable_formula.1} parent=0 // pred_check
    _
  $region11: #{general_learnable_formula.1} parent=0 // pred_check_branch
    %15 = sbr.rel (0) target = $region13
  $region12: #{general_learnable_formula.1} parent=0 // pred_region
    _
  $region13: #{general_learnable_formula.1} parent=0 // pred_fallthru
    _
  // Predicated region
  $region14: #{general_learnable_formula.1} parent=0 // pred_check
    _
  $region15: #{general_learnable_formula.1} parent=0 // pred_check_branch
    %17 = sbr.rel (0) target = $region17
  $region16: #{general_learnable_formula.1} parent=0 // pred_region
    _
  $region17: #{general_learnable_formula.1} parent=0 // pred_fallthru
    _
  // Predicated region
  $region18: #{general_learnable_formula.1} parent=0 // pred_check
    _
  $region19: #{general_learnable_formula.1} parent=0 // pred_check_branch
    %19 = sbr.rel (0) target = $region21
  $region20: #{general_learnable_formula.1} parent=0 // pred_region
    _
  $region21: #{general_learnable_formula.1} parent=0 // pred_fallthru
    _
  %v20 = vld [vmem:[%s0] sm:$0xff]
  %v21 = vld [vmem:[%s0 + $0x8] sm:$0xff]
  %v22 = vld [vmem:[%s0 + $0x10] sm:$0xff]
  %v23 = vld [vmem:[%s0 + $0x18] sm:$0xff]
  %v24 = vld [vmem:[%s0 + $0x20] sm:$0xff]
  %v25 = vld [vmem:[%s0 + $0x28] sm:$0xff]
  %v26 = vld [vmem:[%s2] sm:$0xff]
  %v27 = vld [vmem:[%s2 + $0x8] sm:$0xff]
  %v28 = vld [vmem:[%s2 + $0x10] sm:$0xff]
  %v29 = vld [vmem:[%s2 + $0x18] sm:$0xff]
  %v30 = vld [vmem:[%s2 + $0x20] sm:$0xff]
  %v31 = vld [vmem:[%s2 + $0x28] sm:$0xff]
  %v32 = vld [vmem:[%s2 + $0x30] sm:$0xff]
  %v33 = vld [vmem:[%s2 + $0x38] sm:$0xff]
  %vm34 = vcmask 523264
  %v36 = vsel %vm34, %v20, 0
  %v39 = vsel %vm34, %v21, 0
  %v42 = vsel %vm34, %v22, 0
  %v45 = vsel %vm34, %v23, 0
  %v48 = vsel %vm34, %v24, 0
  %v51 = vsel %vm34, %v25, 0
  %53 = vmatprep.subr.mxu0 0.0
  %54 = vmatpush1.msra.mxu0 %v26
  %55 = vmatprep.subr.mxu0 0.0
  %56 = vmatpush1.msra.mxu0 %v27
  %57 = vmatprep.subr.mxu0 0.0
  %58 = vmatpush1.msra.mxu0 %v28
  %59 = vmatprep.subr.mxu0 0.0
  %60 = vmatpush1.msra.mxu0 %v29
  %61 = vmatprep.subr.mxu0 0.0
  %62 = vmatpush1.msra.mxu0 %v30
  %63 = vmatprep.subr.mxu0 0.0
  %64 = vmatpush1.msra.mxu0 %v31
  %65 = vmatprep.subr.mxu0 0.0
  %66 = vmatpush1.msra.mxu0 %v32
  %67 = vmatprep.subr.mxu0 0.0
  %68 = vmatpush1.msra.mxu0 %v33
  %69 = vmatprep.subr.mxu0 0.0
  %70 = vmatpush1.msra.mxu0 0.0
  %71 = vmatprep.subr.mxu0 0.0
  %72 = vmatpush1.msra.mxu0 0.0
  %73 = vmatprep.subr.mxu0 0.0
  %74 = vmatpush1.msra.mxu0 0.0
  %75 = vmatprep.subr.mxu0 0.0
  %76 = vmatpush1.msra.mxu0 0.0
  %77 = vmatprep.subr.mxu0 0.0
  %78 = vmatpush1.msra.mxu0 0.0
  %79 = vmatprep.subr.mxu0 0.0
  %80 = vmatpush1.msra.mxu0 0.0
  %81 = vmatprep.subr.mxu0 0.0
  %82 = vmatpush1.msra.mxu0 0.0
  %83 = vmatprep.subr.mxu0 0.0
  %84 = vmatpush1.msra.mxu0 0.0
  %85 = vmatprep.subr.mxu0 0.0
  %86 = vmatpush1.msra.mxu0 0.0
  %87 = vmatprep.subr.mxu0 0.0
  %88 = vmatpush1.msra.mxu0 0.0
  %89 = vmatprep.subr.mxu0 0.0
  %90 = vmatpush1.msra.mxu0 0.0
  %91 = vmatprep.subr.mxu0 0.0
  %92 = vmatpush1.msra.mxu0 0.0
  %93 = vmatprep.subr.mxu0 0.0
  %94 = vmatpush1.msra.mxu0 0.0
  %95 = vmatprep.subr.mxu0 0.0
  %96 = vmatpush1.msra.mxu0 0.0
  %97 = vmatprep.subr.mxu0 0.0
  %98 = vmatpush1.msra.mxu0 0.0
  %99 = vmatprep.subr.mxu0 0.0
  %100 = vmatpush1.msra.mxu0 0.0
  %101 = vmatprep.subr.mxu0 0.0
  %102 = vmatpush1.msra.mxu0 0.0
  %103 = vmatprep.subr.mxu0 0.0
  %104 = vmatpush1.msra.mxu0 0.0
  %105 = vmatprep.subr.mxu0 0.0
  %106 = vmatpush1.msra.mxu0 0.0
  %107 = vmatprep.subr.mxu0 0.0
  %108 = vmatpush1.msra.mxu0 0.0
  %109 = vmatprep.subr.mxu0 0.0
  %110 = vmatpush1.msra.mxu0 0.0
  %111 = vmatprep.subr.mxu0 0.0
  %112 = vmatpush1.msra.mxu0 0.0
  %113 = vmatprep.subr.mxu0 0.0
  %114 = vmatpush1.msra.mxu0 0.0
  %115 = vmatprep.subr.mxu0 0.0
  %116 = vmatpush1.msra.mxu0 0.0
  %117 = vmatprep.mubr.f32.mxu0 0.0
  %118 = vmatmul.mubr.f32.gmra.mrb[0].mxu0 %v36
  %v119 = vpop.f32.mrb[0].mxu0
  %v120 = vadd.f32 0.0, %v119
  %v121 = vpop.f32.mrb[0].mxu0
  %122 = vmatprep.mubr.f32.mxu0 0.0
  %123 = vmatmul.mubr.f32.gmra.mrb[0].mxu0 %v39
  %v124 = vpop.f32.mrb[0].mxu0
  %v125 = vadd.f32 0.0, %v124
  %v126 = vpop.f32.mrb[0].mxu0
  %127 = vmatprep.mubr.f32.mxu0 0.0
  %128 = vmatmul.mubr.f32.gmra.mrb[0].mxu0 %v42
  %v129 = vpop.f32.mrb[0].mxu0
  %v130 = vadd.f32 0.0, %v129
  %v131 = vpop.f32.mrb[0].mxu0
  %132 = vmatprep.mubr.f32.mxu0 0.0
  %133 = vmatmul.mubr.f32.gmra.mrb[0].mxu0 %v45
  %v134 = vpop.f32.mrb[0].mxu0
  %v135 = vadd.f32 0.0, %v134
  %v136 = vpop.f32.mrb[0].mxu0
  %137 = vmatprep.mubr.f32.mxu0 0.0
  %138 = vmatmul.mubr.f32.gmra.mrb[0].mxu0 %v48
  %v139 = vpop.f32.mrb[0].mxu0
  %v140 = vadd.f32 0.0, %v139
  %v141 = vpop.f32.mrb[0].mxu0
  %142 = vmatprep.mubr.f32.mxu0 0.0
  %143 = vmatmul.mubr.f32.gmra.mrb[0].mxu0 %v51
  %v144 = vpop.f32.mrb[0].mxu0
  %v145 = vadd.f32 0.0, %v144
  %v146 = vpop.f32.mrb[0].mxu0
  %147 = vdwg.mxu0
  %v148 = vld [vmem:[%s3] sm:$0xff]
  %v149 = vld [vmem:[%s3 + $0x8] sm:$0xff]
  %v150 = vld [vmem:[%s3 + $0x10] sm:$0xff]
  %v151 = vld [vmem:[%s3 + $0x18] sm:$0xff]
  %v152 = vld [vmem:[%s3 + $0x20] sm:$0xff]
  %v153 = vld [vmem:[%s3 + $0x28] sm:$0xff]
  %v154 = vld [vmem:[%s3 + $0x30] sm:$0xff]
  %v155 = vld [vmem:[%s3 + $0x38] sm:$0xff]
  %v156 = vld [vmem:[%s3 + $0x40] sm:$0xff]
  %v157 = vld [vmem:[%s3 + $0x48] sm:$0xff]
  %v158 = vld [vmem:[%s3 + $0x50] sm:$0xff]
  %v159 = vld [vmem:[%s3 + $0x58] sm:$0xff]
  %v160 = vld [vmem:[%s3 + $0x60] sm:$0xff]
  %v161 = vld [vmem:[%s3 + $0x68] sm:$0xff]
  %v162 = vld [vmem:[%s3 + $0x70] sm:$0xff]
  %v163 = vld [vmem:[%s3 + $0x78] sm:$0xff]
  %v164 = vld [vmem:[%s3 + $0x80] sm:$0xff]
  %v165 = vld [vmem:[%s3 + $0x88] sm:$0xff]
  %v166 = vld [vmem:[%s3 + $0x90] sm:$0xff]
  %v167 = vld [vmem:[%s3 + $0x98] sm:$0xff]
  %v168 = vld [vmem:[%s3 + $0xa0] sm:$0xff]
  %v169 = vld [vmem:[%s3 + $0xa8] sm:$0xff]
  %v170 = vld [vmem:[%s3 + $0xb0] sm:$0xff]
  %v171 = vld [vmem:[%s3 + $0xb8] sm:$0xff]
  %v172 = vld [vmem:[%s3 + $0xc0] sm:$0xff]
  %v173 = vld [vmem:[%s3 + $0xc8] sm:$0xff]
  %v174 = vld [vmem:[%s3 + $0xd0] sm:$0xff]
  %v175 = vld [vmem:[%s3 + $0xd8] sm:$0xff]
  %v176 = vld [vmem:[%s3 + $0xe0] sm:$0xff]
  %v177 = vld [vmem:[%s3 + $0xe8] sm:$0xff]
  %v178 = vld [vmem:[%s3 + $0xf0] sm:$0xff]
  %v179 = vld [vmem:[%s3 + $0xf8] sm:$0xff]
  %180 = vmatprep.subr.mxu0 %v149
  %181 = vmatpush1.msra.mxu0 %v148
  %182 = vmatprep.subr.mxu0 %v151
  %183 = vmatpush1.msra.mxu0 %v150
  %184 = vmatprep.subr.mxu0 %v153
  %185 = vmatpush1.msra.mxu0 %v152
  %186 = vmatprep.subr.mxu0 %v155
  %187 = vmatpush1.msra.mxu0 %v154
  %188 = vmatprep.subr.mxu0 %v157
  %189 = vmatpush1.msra.mxu0 %v156
  %190 = vmatprep.subr.mxu0 %v159
  %191 = vmatpush1.msra.mxu0 %v158
  %192 = vmatprep.subr.mxu0 %v161
  %193 = vmatpush1.msra.mxu0 %v160
  %194 = vmatprep.subr.mxu0 %v163
  %195 = vmatpush1.msra.mxu0 %v162
  %196 = vmatprep.subr.mxu0 %v165
  %197 = vmatpush1.msra.mxu0 %v164
  %198 = vmatprep.subr.mxu0 %v167
  %199 = vmatpush1.msra.mxu0 %v166
  %200 = vmatprep.subr.mxu0 %v169
  %201 = vmatpush1.msra.mxu0 %v168
  %202 = vmatprep.subr.mxu0 %v171
  %203 = vmatpush1.msra.mxu0 %v170
  %204 = vmatprep.subr.mxu0 %v173
  %205 = vmatpush1.msra.mxu0 %v172
  %206 = vmatprep.subr.mxu0 %v175
  %207 = vmatpush1.msra.mxu0 %v174
  %208 = vmatprep.subr.mxu0 %v177
  %209 = vmatpush1.msra.mxu0 %v176
  %210 = vmatprep.subr.mxu0 %v179
  %211 = vmatpush1.msra.mxu0 %v178
  %212 = vmatprep.subr.mxu0 0.0
  %213 = vmatpush1.msra.mxu0 0.0
  %214 = vmatprep.subr.mxu0 0.0
  %215 = vmatpush1.msra.mxu0 0.0
  %216 = vmatprep.subr.mxu0 0.0
  %217 = vmatpush1.msra.mxu0 0.0
  %218 = vmatprep.subr.mxu0 0.0
  %219 = vmatpush1.msra.mxu0 0.0
  %220 = vmatprep.subr.mxu0 0.0
  %221 = vmatpush1.msra.mxu0 0.0
  %222 = vmatprep.subr.mxu0 0.0
  %223 = vmatpush1.msra.mxu0 0.0
  %224 = vmatprep.subr.mxu0 0.0
  %225 = vmatpush1.msra.mxu0 0.0
  %226 = vmatprep.subr.mxu0 0.0
  %227 = vmatpush1.msra.mxu0 0.0
  %228 = vmatprep.subr.mxu0 0.0
  %229 = vmatpush1.msra.mxu0 0.0
  %230 = vmatprep.subr.mxu0 0.0
  %231 = vmatpush1.msra.mxu0 0.0
  %232 = vmatprep.subr.mxu0 0.0
  %233 = vmatpush1.msra.mxu0 0.0
  %234 = vmatprep.subr.mxu0 0.0
  %235 = vmatpush1.msra.mxu0 0.0
  %236 = vmatprep.subr.mxu0 0.0
  %237 = vmatpush1.msra.mxu0 0.0
  %238 = vmatprep.subr.mxu0 0.0
  %239 = vmatpush1.msra.mxu0 0.0
  %240 = vmatprep.subr.mxu0 0.0
  %241 = vmatpush1.msra.mxu0 0.0
  %242 = vmatprep.subr.mxu0 0.0
  %243 = vmatpush1.msra.mxu0 0.0
  %244 = vmatprep.mubr.f32.mxu0 0.0
  %245 = vmatmul.mubr.f32.gmra.mrb[0].mxu0 %v120
  %v246 = vpop.f32.mrb[0].mxu0
  %v247 = vadd.f32 0.0, %v246
  %v248 = vpop.f32.mrb[0].mxu0
  %v249 = vadd.f32 0.0, %v248
  %250 = vmatprep.mubr.f32.mxu0 0.0
  %251 = vmatmul.mubr.f32.gmra.mrb[0].mxu0 %v125
  %v252 = vpop.f32.mrb[0].mxu0
  %v253 = vadd.f32 0.0, %v252
  %v254 = vpop.f32.mrb[0].mxu0
  %v255 = vadd.f32 0.0, %v254
  %256 = vmatprep.mubr.f32.mxu0 0.0
  %257 = vmatmul.mubr.f32.gmra.mrb[0].mxu0 %v130
  %v258 = vpop.f32.mrb[0].mxu0
  %v259 = vadd.f32 0.0, %v258
  %v260 = vpop.f32.mrb[0].mxu0
  %v261 = vadd.f32 0.0, %v260
  %262 = vmatprep.mubr.f32.mxu0 0.0
  %263 = vmatmul.mubr.f32.gmra.mrb[0].mxu0 %v135
  %v264 = vpop.f32.mrb[0].mxu0
  %v265 = vadd.f32 0.0, %v264
  %v266 = vpop.f32.mrb[0].mxu0
  %v267 = vadd.f32 0.0, %v266
  %268 = vmatprep.mubr.f32.mxu0 0.0
  %269 = vmatmul.mubr.f32.gmra.mrb[0].mxu0 %v140
  %v270 = vpop.f32.mrb[0].mxu0
  %v271 = vadd.f32 0.0, %v270
  %v272 = vpop.f32.mrb[0].mxu0
  %v273 = vadd.f32 0.0, %v272
  %274 = vmatprep.mubr.f32.mxu0 0.0
  %275 = vmatmul.mubr.f32.gmra.mrb[0].mxu0 %v145
  %v276 = vpop.f32.mrb[0].mxu0
  %v277 = vadd.f32 0.0, %v276
  %v278 = vpop.f32.mrb[0].mxu0
  %v279 = vadd.f32 0.0, %v278
  %280 = vdwg.mxu0
  %v281 = vld [vmem:[%s1] sm:$0xff]
  %v282 = vld [vmem:[%s1 + $0x8] sm:$0xff]
  %v283 = vld [vmem:[%s1 + $0x10] sm:$0xff]
  %v284 = vld [vmem:[%s1 + $0x18] sm:$0xff]
  %v285 = vld [vmem:[%s1 + $0x20] sm:$0xff]
  %v286 = vld [vmem:[%s1 + $0x28] sm:$0xff]
  %288 = vset.pattern.permute.xlu0 0
  %289 = vperm.xlu0 %288, %v281
  %v290 = vpop.permute.xlu0 %289
  %293 = vset.pattern.permute.xlu0 0
  %294 = vperm.xlu0 %293, %v282
  %v295 = vpop.permute.xlu0 %294
  %298 = vset.pattern.permute.xlu0 0
  %299 = vperm.xlu0 %298, %v283
  %v300 = vpop.permute.xlu0 %299
  %303 = vset.pattern.permute.xlu0 0
  %304 = vperm.xlu0 %303, %v284
  %v305 = vpop.permute.xlu0 %304
  %308 = vset.pattern.permute.xlu0 0
  %309 = vperm.xlu0 %308, %v285
  %v310 = vpop.permute.xlu0 %309
  %313 = vset.pattern.permute.xlu0 0
  %314 = vperm.xlu0 %313, %v286
  %v315 = vpop.permute.xlu0 %314
  %v317 = vadd.f32 %v247, %v290
  %v318 = vadd.f32 %v253, %v295
  %v319 = vadd.f32 %v259, %v300
  %v320 = vadd.f32 %v265, %v305
  %v321 = vadd.f32 %v271, %v310
  %v322 = vadd.f32 %v277, %v315
  %v323 = vmul.f32 %v317, %v318
  %v324 = vmul.f32 %v249, %v255
  %v325 = vsub.f32 %v323, %v324
  %v326 = vmul.f32 %v317, %v255
  %v327 = vmul.f32 %v249, %v318
  %v328 = vadd.f32 %v326, %v327
  %v329 = vmul.f32 %v325, %v319
  %v330 = vmul.f32 %v328, %v261
  %v331 = vsub.f32 %v329, %v330
  %v332 = vmul.f32 %v325, %v261
  %v333 = vmul.f32 %v328, %v319
  %v334 = vadd.f32 %v332, %v333
  %v335 = vmul.f32 %v320, %v321
  %v336 = vmul.f32 %v267, %v273
  %v337 = vsub.f32 %v335, %v336
  %v338 = vmul.f32 %v320, %v273
  %v339 = vmul.f32 %v267, %v321
  %v340 = vadd.f32 %v338, %v339
  %v341 = vmul.f32 %v337, %v322
  %v342 = vmul.f32 %v340, %v279
  %v343 = vsub.f32 %v341, %v342
  %v344 = vmul.f32 %v337, %v279
  %v345 = vmul.f32 %v340, %v322
  %v346 = vadd.f32 %v344, %v345
  %v347 = vmul.f32 %v331, %v343
  %v348 = vmul.f32 %v334, %v346
  %v349 = vadd.f32 %v347, %v348
  %v350 = vmul.f32 %v334, %v343
  %v351 = vmul.f32 %v331, %v346
  %v352 = vsub.f32 %v350, %v351
  %v353 = vld [vmem:[%s4] sm:$0xff]
  %v354 = vld [vmem:[%s4 + $0x8] sm:$0xff]
  %v355 = vld [vmem:[%s4 + $0x10] sm:$0xff]
  %v356 = vld [vmem:[%s4 + $0x18] sm:$0xff]
  %v357 = vld [vmem:[%s4 + $0x20] sm:$0xff]
  %v358 = vld [vmem:[%s4 + $0x28] sm:$0xff]
  %v359 = vld [vmem:[%s4 + $0x30] sm:$0xff]
  %v360 = vld [vmem:[%s4 + $0x38] sm:$0xff]
  %v361 = vld [vmem:[%s4 + $0x40] sm:$0xff]
  %v362 = vld [vmem:[%s4 + $0x48] sm:$0xff]
  %v363 = vld [vmem:[%s4 + $0x50] sm:$0xff]
  %v364 = vld [vmem:[%s4 + $0x58] sm:$0xff]
  %v365 = vld [vmem:[%s4 + $0x60] sm:$0xff]
  %v366 = vld [vmem:[%s4 + $0x68] sm:$0xff]
  %v367 = vld [vmem:[%s4 + $0x70] sm:$0xff]
  %v368 = vld [vmem:[%s4 + $0x78] sm:$0xff]
  %v369 = vld [vmem:[%s4 + $0x80] sm:$0xff]
  %v370 = vld [vmem:[%s4 + $0x88] sm:$0xff]
  %v371 = vld [vmem:[%s4 + $0x90] sm:$0xff]
  %v372 = vld [vmem:[%s4 + $0x98] sm:$0xff]
  %v373 = vld [vmem:[%s4 + $0xa0] sm:$0xff]
  %v374 = vld [vmem:[%s4 + $0xa8] sm:$0xff]
  %v375 = vld [vmem:[%s4 + $0xb0] sm:$0xff]
  %v376 = vld [vmem:[%s4 + $0xb8] sm:$0xff]
  %v377 = vld [vmem:[%s4 + $0xc0] sm:$0xff]
  %v378 = vld [vmem:[%s4 + $0xc8] sm:$0xff]
  %v379 = vld [vmem:[%s4 + $0xd0] sm:$0xff]
  %v380 = vld [vmem:[%s4 + $0xd8] sm:$0xff]
  %v381 = vld [vmem:[%s4 + $0xe0] sm:$0xff]
  %v382 = vld [vmem:[%s4 + $0xe8] sm:$0xff]
  %v383 = vld [vmem:[%s4 + $0xf0] sm:$0xff]
  %v384 = vld [vmem:[%s4 + $0xf8] sm:$0xff]
  %385 = vmatprep.subr.mxu0 0.0
  %386 = vmatpush1.msra.mxu0 %v353
  %387 = vmatprep.subr.mxu0 0.0
  %388 = vmatpush1.msra.mxu0 %v354
  %389 = vmatprep.subr.mxu0 0.0
  %390 = vmatpush1.msra.mxu0 %v355
  %391 = vmatprep.subr.mxu0 0.0
  %392 = vmatpush1.msra.mxu0 %v356
  %393 = vmatprep.subr.mxu0 0.0
  %394 = vmatpush1.msra.mxu0 %v357
  %395 = vmatprep.subr.mxu0 0.0
  %396 = vmatpush1.msra.mxu0 %v358
  %397 = vmatprep.subr.mxu0 0.0
  %398 = vmatpush1.msra.mxu0 %v359
  %399 = vmatprep.subr.mxu0 0.0
  %400 = vmatpush1.msra.mxu0 %v360
  %401 = vmatprep.subr.mxu0 0.0
  %402 = vmatpush1.msra.mxu0 %v361
  %403 = vmatprep.subr.mxu0 0.0
  %404 = vmatpush1.msra.mxu0 %v362
  %405 = vmatprep.subr.mxu0 0.0
  %406 = vmatpush1.msra.mxu0 %v363
  %407 = vmatprep.subr.mxu0 0.0
  %408 = vmatpush1.msra.mxu0 %v364
  %409 = vmatprep.subr.mxu0 0.0
  %410 = vmatpush1.msra.mxu0 %v365
  %411 = vmatprep.subr.mxu0 0.0
  %412 = vmatpush1.msra.mxu0 %v366
  %413 = vmatprep.subr.mxu0 0.0
  %414 = vmatpush1.msra.mxu0 %v367
  %415 = vmatprep.subr.mxu0 0.0
  %416 = vmatpush1.msra.mxu0 %v368
  %417 = vmatprep.subr.mxu0 0.0
  %418 = vmatpush1.msra.mxu0 %v369
  %419 = vmatprep.subr.mxu0 0.0
  %420 = vmatpush1.msra.mxu0 %v370
  %421 = vmatprep.subr.mxu0 0.0
  %422 = vmatpush1.msra.mxu0 %v371
  %423 = vmatprep.subr.mxu0 0.0
  %424 = vmatpush1.msra.mxu0 %v372
  %425 = vmatprep.subr.mxu0 0.0
  %426 = vmatpush1.msra.mxu0 %v373
  %427 = vmatprep.subr.mxu0 0.0
  %428 = vmatpush1.msra.mxu0 %v374
  %429 = vmatprep.subr.mxu0 0.0
  %430 = vmatpush1.msra.mxu0 %v375
  %431 = vmatprep.subr.mxu0 0.0
  %432 = vmatpush1.msra.mxu0 %v376
  %433 = vmatprep.subr.mxu0 0.0
  %434 = vmatpush1.msra.mxu0 %v377
  %435 = vmatprep.subr.mxu0 0.0
  %436 = vmatpush1.msra.mxu0 %v378
  %437 = vmatprep.subr.mxu0 0.0
  %438 = vmatpush1.msra.mxu0 %v379
  %439 = vmatprep.subr.mxu0 0.0
  %440 = vmatpush1.msra.mxu0 %v380
  %441 = vmatprep.subr.mxu0 0.0
  %442 = vmatpush1.msra.mxu0 %v381
  %443 = vmatprep.subr.mxu0 0.0
  %444 = vmatpush1.msra.mxu0 %v382
  %445 = vmatprep.subr.mxu0 0.0
  %446 = vmatpush1.msra.mxu0 %v383
  %447 = vmatprep.subr.mxu0 0.0
  %448 = vmatpush1.msra.mxu0 %v384
  %449 = vmatprep.mubr.f32.mxu0 %v352
  %450 = vmatmul.mubr.f32.gmra.mrb[0].mxu0 %v349
  %v451 = vpop.f32.mrb[0].mxu0
  %v452 = vadd.f32 0.0, %v451
  %v453 = vpop.f32.mrb[0].mxu0
  %454 = vdwg.mxu0
  %v455 = vmul.f32 %v452, 0.0078125
  %456 = vst [vmem:[%s5] sm:$0xff] %v455
  // Predicated region
  $region22: #{general_learnable_formula.1} parent=0 // pred_check
    _
  $region23: #{general_learnable_formula.1} parent=0 // pred_check_branch
    %458 = sbr.rel (0) target = $region25
  $region24: #{general_learnable_formula.1} parent=0 // pred_region
    _
  $region25: #{general_learnable_formula.1} parent=0 // pred_fallthru
    _
  // Predicated region
  $region26: #{general_learnable_formula.1} parent=0 // pred_check
    _
  $region27: #{general_learnable_formula.1} parent=0 // pred_check_branch
    %460 = sbr.rel (0) target = $region29
  $region28: #{general_learnable_formula.1} parent=0 // pred_region
    _
  $region29: #{general_learnable_formula.1} parent=0 // pred_fallthru
    _

</llo_original>
